<compile_context>
chip_gen: v6e
topology: v6e:2x2x1
jax: 0.10.0
libtpu: 0.0.40
codegen_flags: <defaults>
</compile_context>

<pallas_src>
import functools

import jax
import jax.numpy as jnp
from jax.experimental import pallas as pl
from jax.experimental.pallas import tpu as pltpu


def _round_up(x, m):
    return ((x + m - 1) // m) * m


def _pad2(a, rows, cols):
    a = jnp.asarray(a)
    out = jnp.zeros((rows, cols), a.dtype)
    return out.at[: a.shape[0], : a.shape[1]].set(a)


def _actor_kernel(lim_ref, x_ref, w1_ref, b1_ref, w2_ref, b2_ref, w3_ref, b3_ref, o_ref):
    lim = lim_ref[0, 0]                       # f32 scalar from SMEM
    cd = w1_ref.dtype                         # matmul input dtype (bf16)

    x = x_ref[...].astype(cd)                 # in-kernel cast; x arrives unpadded f32

    # Layer 1: Linear + ReLU  (MXU matmul, f32 accumulation)
    h1 = jnp.dot(x, w1_ref[...], preferred_element_type=jnp.float32) + b1_ref[...]
    h1 = jnp.maximum(h1, 0.0).astype(cd)

    # Layer 2: Linear + ReLU
    h2 = jnp.dot(h1, w2_ref[...], preferred_element_type=jnp.float32) + b2_ref[...]
    h2 = jnp.maximum(h2, 0.0).astype(cd)

    # Layer 3: Linear + Tanh, scaled by action limit
    h3 = jnp.dot(h2, w3_ref[...], preferred_element_type=jnp.float32) + b3_ref[...]
    o_ref[...] = (jnp.tanh(h3) * lim).astype(o_ref.dtype)


def prepare_actor_params(params, *, compute_dtype=jnp.bfloat16, lane_multiple=128):
    """One-time pad/cast of the weights (call once, reuse across rollout steps).

    Weights are stored as [in_features, out_features]; the kernel computes x @ W + b, which
    matches PyTorch's x @ W.T + b with W of shape [out, in].  Only the hidden dim is padded
    (to `lane_multiple`; use 256 on v6e/v7x for large hidden); s_dim and a_dim stay unpadded.
    Zero padding is exact: padded hidden columns stay zero through bias/ReLU and padded w3
    rows contribute nothing.
    """
    w1, b1 = params["w1"], params["b1"]
    w2, b2 = params["w2"], params["b2"]
    w3, b3 = params["w3"], params["b3"]

    s_dim, hidden = w1.shape
    a_dim = w3.shape[1]
    h_p = _round_up(hidden, lane_multiple)

    return {
        "w1": _pad2(w1, s_dim, h_p).astype(compute_dtype),                  # [s_dim, h_p]
        "b1": _pad2(jnp.reshape(b1, (1, -1)), 1, h_p).astype(jnp.float32),  # [1, h_p]
        "w2": _pad2(w2, h_p, h_p).astype(compute_dtype),                    # [h_p, h_p]
        "b2": _pad2(jnp.reshape(b2, (1, -1)), 1, h_p).astype(jnp.float32),  # [1, h_p]
        "w3": _pad2(w3, h_p, a_dim).astype(compute_dtype),                  # [h_p, a_dim]
        "b3": jnp.reshape(b3, (1, -1)).astype(jnp.float32),                 # [1, a_dim]
    }


def _pick_batch_tile(B, tile_b):
    """Batch tile: multiple of 8 sublanes, >= 2 grid steps when B > 8 (v7x megacore)."""
    if B <= 8:
        return B                      # single full-extent batch block
    half = -(-B // 2)                 # ceil(B / 2)
    return max(8, min(tile_b, _round_up(half, 8)))


@functools.partial(jax.jit, static_argnames=("tile_b",))
def actor_forward(x, prep, lim, *, tile_b=256):
    """x: [B, s_dim] f32. prep: output of prepare_actor_params. Returns [B, a_dim] f32."""
    w1, b1 = prep["w1"], prep["b1"]
    w2, b2 = prep["w2"], prep["b2"]
    w3, b3 = prep["w3"], prep["b3"]

    B, s_dim = x.shape
    h_p = w1.shape[1]
    a_dim = w3.shape[1]

    tb = _pick_batch_tile(B, tile_b)
    grid_b = pl.cdiv(B, tb)

    lim_arr = jnp.full((1, 1), lim, jnp.float32)   # SMEM scalar (no recompile per lim)

    return pl.pallas_call(
        _actor_kernel,
        out_shape=jax.ShapeDtypeStruct((B, a_dim), jnp.float32),
        grid_spec=pltpu.PrefetchScalarGridSpec(
            num_scalar_prefetch=0,
            grid=(grid_b,),
            in_specs=[
                pl.BlockSpec(memory_space=pltpu.MemorySpace.SMEM),   # lim (1,1) f32
                pl.BlockSpec((tb, s_dim), lambda i: (i, 0)),         # x tile (unpadded, full-extent last dim)
                pl.BlockSpec((s_dim, h_p), lambda i: (0, 0)),        # w1 (VMEM-resident)
                pl.BlockSpec((1, h_p), lambda i: (0, 0)),            # b1 (resident)
                pl.BlockSpec((h_p, h_p), lambda i: (0, 0)),          # w2 (resident)
                pl.BlockSpec((1, h_p), lambda i: (0, 0)),            # b2 (resident)
                pl.BlockSpec((h_p, a_dim), lambda i: (0, 0)),        # w3 (resident, a_dim unpadded)
                pl.BlockSpec((1, a_dim), lambda i: (0, 0)),          # b3 (resident)
            ],
            out_specs=pl.BlockSpec((tb, a_dim), lambda i: (i, 0)),   # unpadded output, no post-slice
        ),
        compiler_params=pltpu.CompilerParams(
            dimension_semantics=("parallel",),
        ),
    )(lim_arr, x, w1, b1, w2, b2, w3, b3)


def init_params(key, s_dim, hidden_dim, a_dim):
    """Deterministic synthetic init (uniform, roughly matching PyTorch Linear scale)."""
    ks = jax.random.split(key, 6)

    def lin(kw, kb, fan_in, fan_out):
        bound = 1.0 / jnp.sqrt(fan_in)
        w = jax.random.uniform(kw, (fan_in, fan_out), jnp.float32, -bound, bound)
        b = jax.random.uniform(kb, (1, fan_out), jnp.float32, -bound, bound)
        return w, b

    w1, b1 = lin(ks[0], ks[1], s_dim, hidden_dim)
    w2, b2 = lin(ks[2], ks[3], hidden_dim, hidden_dim)
    w3, b3 = lin(ks[4], ks[5], hidden_dim, a_dim)
    return {"w1": w1, "b1": b1, "w2": w2, "b2": b2, "w3": w3, "b3": b3}


def _reference(x, p, lim, compute_dtype=jnp.bfloat16):
    """Pure-JAX reference with the same mixed precision as the kernel."""
    cd = compute_dtype
    h1 = jnp.maximum(
        jnp.dot(x.astype(cd), p["w1"].astype(cd), preferred_element_type=jnp.float32) + p["b1"], 0.0)
    h2 = jnp.maximum(
        jnp.dot(h1.astype(cd), p["w2"].astype(cd), preferred_element_type=jnp.float32) + p["b2"], 0.0)
    h3 = jnp.dot(h2.astype(cd), p["w3"].astype(cd), preferred_element_type=jnp.float32) + p["b3"]
    return jnp.tanh(h3) * lim


if __name__ == "__main__":
    B, s_dim, hidden_dim, a_dim = 2, 8, 32, 4
    lim = 2.0

    key = jax.random.PRNGKey(0)
    k_x, k_p, k_x2 = jax.random.split(key, 3)
    x = jax.random.normal(k_x, (B, s_dim), jnp.float32)
    params = init_params(k_p, s_dim, hidden_dim, a_dim)

    # One-time pad/cast of weights (hoisted out of the per-step call, per review).
    prep = prepare_actor_params(params)

    # Tiny rollout-sized batch: single grid step, full-extent batch block, no padding anywhere.
    out = jax.block_until_ready(actor_forward(x, prep, lim))
    ref = _reference(x, params, lim)
    assert out.shape == (B, a_dim)
    assert jnp.allclose(out, ref, atol=1e-3, rtol=1e-3)

    # Larger batch: >= 2 grid steps (v7x megacore) with a partial boundary tile (300 % 152 != 0).
    B2 = 300
    x2 = jax.random.normal(k_x2, (B2, s_dim), jnp.float32)
    out2 = jax.block_until_ready(actor_forward(x2, prep, lim))
    ref2 = _reference(x2, params, lim)
    assert out2.shape == (B2, a_dim)
    assert jnp.allclose(out2, ref2, atol=1e-3, rtol=1e-3)

    # Smaller tile => several grid steps, exercising the pipelined multi-step path.
    out3 = jax.block_until_ready(actor_forward(x2, prep, lim, tile_b=64))
    assert jnp.allclose(out3, ref2, atol=1e-3, rtol=1e-3)

    print("KERNEL_OK")
</pallas_src>

<mosaic_0001>
module attributes {stable_mosaic.version = 11 : i64} {
  func.func @_actor_kernel(%arg0: i32, %arg1: memref<1x1xf32, #tpu.memory_space<smem>>, %arg2: memref<2x8xf32, #tpu.memory_space<vmem>>, %arg3: memref<8x128xbf16, #tpu.memory_space<vmem>>, %arg4: memref<1x128xf32, #tpu.memory_space<vmem>>, %arg5: memref<128x128xbf16, #tpu.memory_space<vmem>>, %arg6: memref<1x128xf32, #tpu.memory_space<vmem>>, %arg7: memref<128x4xbf16, #tpu.memory_space<vmem>>, %arg8: memref<1x4xf32, #tpu.memory_space<vmem>>, %arg9: memref<2x4xf32, #tpu.memory_space<vmem>>) attributes {dimension_semantics = [#tpu.dimension_semantics<parallel>], iteration_bounds = array<i64: 1>, scalar_prefetch = 0 : i64, scratch_operands = 0 : i64, tpu.core_type = #tpu.core_type<tc>, window_params = [{transform_indices = @transform_0, window_bounds = array<i64: 1, 1>}, {transform_indices = @transform_1, window_bounds = array<i64: 2, 8>}, {pipeline_mode = #tpu.pipeline_mode<synchronous>, transform_indices = @transform_2, window_bounds = array<i64: 8, 128>}, {pipeline_mode = #tpu.pipeline_mode<synchronous>, transform_indices = @transform_3, window_bounds = array<i64: 1, 128>}, {pipeline_mode = #tpu.pipeline_mode<synchronous>, transform_indices = @transform_4, window_bounds = array<i64: 128, 128>}, {pipeline_mode = #tpu.pipeline_mode<synchronous>, transform_indices = @transform_5, window_bounds = array<i64: 1, 128>}, {pipeline_mode = #tpu.pipeline_mode<synchronous>, transform_indices = @transform_6, window_bounds = array<i64: 128, 4>}, {pipeline_mode = #tpu.pipeline_mode<synchronous>, transform_indices = @transform_7, window_bounds = array<i64: 1, 4>}, {transform_indices = @transform_8, window_bounds = array<i64: 2, 4>}]} {
    %c0 = arith.constant 0 : index
    %c0_0 = arith.constant 0 : index
    %0 = memref.load %arg1[%c0, %c0_0] : memref<1x1xf32, #tpu.memory_space<smem>>
    %c0_1 = arith.constant 0 : index
    %c0_2 = arith.constant 0 : index
    %1 = vector.load %arg2[%c0_1, %c0_2] : memref<2x8xf32, #tpu.memory_space<vmem>>, vector<2x8xf32>
    %2 = arith.truncf %1 : vector<2x8xf32> to vector<2x8xbf16>
    %c0_3 = arith.constant 0 : index
    %c0_4 = arith.constant 0 : index
    %3 = vector.load %arg3[%c0_3, %c0_4] : memref<8x128xbf16, #tpu.memory_space<vmem>>, vector<8x128xbf16>
    %cst = arith.constant dense<0.000000e+00> : vector<2x128xf32>
    %4 = tpu.matmul %2, %3, %cst {dimension_numbers = #tpu.dot_dimension_numbers<[1], [0], [0], [1], [0, 0, 1, 1], [], []>} : vector<2x8xbf16>, vector<8x128xbf16>, vector<2x128xf32> -> vector<2x128xf32>
    %c0_5 = arith.constant 0 : index
    %c0_6 = arith.constant 0 : index
    %5 = vector.load %arg4[%c0_5, %c0_6] : memref<1x128xf32, #tpu.memory_space<vmem>>, vector<1x128xf32>
    %6 = vector.broadcast %5 : vector<1x128xf32> to vector<2x128xf32>
    %7 = arith.addf %4, %6 : vector<2x128xf32>
    %cst_7 = arith.constant 0.000000e+00 : f32
    %8 = vector.broadcast %cst_7 : f32 to vector<2x128xf32>
    %9 = arith.maximumf %7, %8 : vector<2x128xf32>
    %10 = arith.truncf %9 : vector<2x128xf32> to vector<2x128xbf16>
    %c0_8 = arith.constant 0 : index
    %c0_9 = arith.constant 0 : index
    %11 = vector.load %arg5[%c0_8, %c0_9] : memref<128x128xbf16, #tpu.memory_space<vmem>>, vector<128x128xbf16>
    %cst_10 = arith.constant dense<0.000000e+00> : vector<2x128xf32>
    %12 = tpu.matmul %10, %11, %cst_10 {dimension_numbers = #tpu.dot_dimension_numbers<[1], [0], [0], [1], [0, 0, 1, 1], [], []>} : vector<2x128xbf16>, vector<128x128xbf16>, vector<2x128xf32> -> vector<2x128xf32>
    %c0_11 = arith.constant 0 : index
    %c0_12 = arith.constant 0 : index
    %13 = vector.load %arg6[%c0_11, %c0_12] : memref<1x128xf32, #tpu.memory_space<vmem>>, vector<1x128xf32>
    %14 = vector.broadcast %13 : vector<1x128xf32> to vector<2x128xf32>
    %15 = arith.addf %12, %14 : vector<2x128xf32>
    %cst_13 = arith.constant 0.000000e+00 : f32
    %16 = vector.broadcast %cst_13 : f32 to vector<2x128xf32>
    %17 = arith.maximumf %15, %16 : vector<2x128xf32>
    %18 = arith.truncf %17 : vector<2x128xf32> to vector<2x128xbf16>
    %c0_14 = arith.constant 0 : index
    %c0_15 = arith.constant 0 : index
    %19 = vector.load %arg7[%c0_14, %c0_15] : memref<128x4xbf16, #tpu.memory_space<vmem>>, vector<128x4xbf16>
    %cst_16 = arith.constant dense<0.000000e+00> : vector<2x4xf32>
    %20 = tpu.matmul %18, %19, %cst_16 {dimension_numbers = #tpu.dot_dimension_numbers<[1], [0], [0], [1], [0, 0, 1, 1], [], []>} : vector<2x128xbf16>, vector<128x4xbf16>, vector<2x4xf32> -> vector<2x4xf32>
    %c0_17 = arith.constant 0 : index
    %c0_18 = arith.constant 0 : index
    %21 = vector.load %arg8[%c0_17, %c0_18] : memref<1x4xf32, #tpu.memory_space<vmem>>, vector<1x4xf32>
    %22 = vector.broadcast %21 : vector<1x4xf32> to vector<2x4xf32>
    %23 = arith.addf %20, %22 : vector<2x4xf32>
    %24 = math.tanh %23 : vector<2x4xf32>
    %25 = vector.broadcast %0 : f32 to vector<2x4xf32>
    %26 = arith.mulf %24, %25 : vector<2x4xf32>
    %c0_19 = arith.constant 0 : index
    %c0_20 = arith.constant 0 : index
    %27 = vector.load %arg9[%c0_19, %c0_20] : memref<2x4xf32, #tpu.memory_space<vmem>>, vector<2x4xf32>
    tpu.vector_store %arg9[%c0_19, %c0_20], %26 {strides = array<i32>} : memref<2x4xf32, #tpu.memory_space<vmem>>, vector<2x4xf32>,
    return
  }
  func.func @transform_0(%arg0: i32) -> (i32, i32) {
    %c0_i32 = arith.constant 0 : i32
    %c0_i32_0 = arith.constant 0 : i32
    %c0_i32_1 = arith.constant 0 : i32
    return %c0_i32, %c0_i32_0 : i32, i32
  }
  func.func @transform_1(%arg0: i32) -> (i32, i32) {
    %c0_i32 = arith.constant 0 : i32
    %c0_i32_0 = arith.constant 0 : i32
    return %arg0, %c0_i32 : i32, i32
  }
  func.func @transform_2(%arg0: i32) -> (i32, i32) {
    %c0_i32 = arith.constant 0 : i32
    %c0_i32_0 = arith.constant 0 : i32
    %c0_i32_1 = arith.constant 0 : i32
    return %c0_i32, %c0_i32_0 : i32, i32
  }
  func.func @transform_3(%arg0: i32) -> (i32, i32) {
    %c0_i32 = arith.constant 0 : i32
    %c0_i32_0 = arith.constant 0 : i32
    %c0_i32_1 = arith.constant 0 : i32
    return %c0_i32, %c0_i32_0 : i32, i32
  }
  func.func @transform_4(%arg0: i32) -> (i32, i32) {
    %c0_i32 = arith.constant 0 : i32
    %c0_i32_0 = arith.constant 0 : i32
    %c0_i32_1 = arith.constant 0 : i32
    return %c0_i32, %c0_i32_0 : i32, i32
  }
  func.func @transform_5(%arg0: i32) -> (i32, i32) {
    %c0_i32 = arith.constant 0 : i32
    %c0_i32_0 = arith.constant 0 : i32
    %c0_i32_1 = arith.constant 0 : i32
    return %c0_i32, %c0_i32_0 : i32, i32
  }
  func.func @transform_6(%arg0: i32) -> (i32, i32) {
    %c0_i32 = arith.constant 0 : i32
    %c0_i32_0 = arith.constant 0 : i32
    %c0_i32_1 = arith.constant 0 : i32
    return %c0_i32, %c0_i32_0 : i32, i32
  }
  func.func @transform_7(%arg0: i32) -> (i32, i32) {
    %c0_i32 = arith.constant 0 : i32
    %c0_i32_0 = arith.constant 0 : i32
    %c0_i32_1 = arith.constant 0 : i32
    return %c0_i32, %c0_i32_0 : i32, i32
  }
  func.func @transform_8(%arg0: i32) -> (i32, i32) {
    %c0_i32 = arith.constant 0 : i32
    %c0_i32_0 = arith.constant 0 : i32
    return %arg0, %c0_i32 : i32, i32
  }
}

</mosaic_0001>

<llo_original>
// kernel: actor_forward.1
$region0: #{actor_forward.1}
  #allocation0 [shape = 'u32[]', space=smem, size = 0x4, offset = 0x4, fixed_abs, tag = 'smem constant byte address 0x4 - core index']
  #allocation1 [shape = 'u32[144,128]{1,0:T(1,128)}', space=vmem, size = 0x12000, scoped, tag = 'internal scratch']
  #allocation2 [shape = 'f32[1,1]{1,0:T(1,128)S(6)}', space=smem, size = 0x200, scoped, tag = 'scoped memory for actor_forward.1']
  %s0 = inlined_call_operand.<no memory space> [shape: f32[1,1], index: 0, kind: input, shape index: {}]
  %s1 = inlined_call_operand.vmem [shape: f32[2,8], index: 1, kind: input, shape index: {}]
  %s2 = inlined_call_operand.vmem [shape: bf16[8,128], index: 2, kind: input, shape index: {}]
  %s3 = inlined_call_operand.vmem [shape: f32[1,128], index: 3, kind: input, shape index: {}]
  %s4 = inlined_call_operand.vmem [shape: bf16[128,128], index: 4, kind: input, shape index: {}]
  %s5 = inlined_call_operand.vmem [shape: f32[1,128], index: 5, kind: input, shape index: {}]
  %s6 = inlined_call_operand.vmem [shape: bf16[128,4], index: 6, kind: input, shape index: {}]
  %s7 = inlined_call_operand.vmem [shape: f32[1,4], index: 7, kind: input, shape index: {}]
  %s8 = inlined_call_operand.hbm [shape: f32[2,4], index: 8, kind: output, shape index: {}]
  %s9 = sld [smem:[#allocation0]]
  $region42: #{actor_forward.1} parent=0
    _
  %s11 = ssub.s32 1, %s9
  %s12 = scalar_select 0, %s11, %s9
  %13 = sst [smem:[#allocation2]] %s0
  $region1: #{actor_forward.1} parent=0
    #allocation3 [shape = 'u8[1024]{0}', space=vmem, size = 0x400, scoped, tag = 'output window, operand 0, single buffered']
    #allocation4 [shape = 's32[1]{0}', space=sflag, size = 0x4, scoped, tag = 'scoped memory for actor_forward.1']
    %14 = vsyncpa [#allocation4], 0
    // Predicated region
    $region2: #{actor_forward.1} parent=1 // pred_check
      _
    $region3: #{actor_forward.1} parent=1 // pred_check_branch
      %16 = sbr.rel (0) target = $region5
    $region4: #{actor_forward.1} parent=1 // pred_region
      _
    $region5: #{actor_forward.1} parent=1 // pred_fallthru
      _
    // Predicated region
    $region6: #{actor_forward.1} parent=1 // pred_check
      _
    $region7: #{actor_forward.1} parent=1 // pred_check_branch
      %18 = sbr.rel (0) target = $region9
    $region8: #{actor_forward.1} parent=1 // pred_region
      _
    $region9: #{actor_forward.1} parent=1 // pred_fallthru
      _
    // Predicated region
    $region10: #{actor_forward.1} parent=1 // pred_check
      _
    $region11: #{actor_forward.1} parent=1 // pred_check_branch
      %20 = sbr.rel (0) target = $region13
    $region12: #{actor_forward.1} parent=1 // pred_region
      _
    $region13: #{actor_forward.1} parent=1 // pred_fallthru
      _
    // Predicated region
    $region14: #{actor_forward.1} parent=1 // pred_check
      _
    $region15: #{actor_forward.1} parent=1 // pred_check_branch
      %22 = sbr.rel (0) target = $region17
    $region16: #{actor_forward.1} parent=1 // pred_region
      _
    $region17: #{actor_forward.1} parent=1 // pred_fallthru
      _
    // Predicated region
    $region18: #{actor_forward.1} parent=1 // pred_check
      _
    $region19: #{actor_forward.1} parent=1 // pred_check_branch
      %24 = sbr.rel (0) target = $region21
    $region20: #{actor_forward.1} parent=1 // pred_region
      _
    $region21: #{actor_forward.1} parent=1 // pred_fallthru
      _
    // Predicated region
    $region22: #{actor_forward.1} parent=1 // pred_check
      _
    $region23: #{actor_forward.1} parent=1 // pred_check_branch
      %26 = sbr.rel (0) target = $region25
    $region24: #{actor_forward.1} parent=1 // pred_region
      _
    $region25: #{actor_forward.1} parent=1 // pred_fallthru
      _
    // Predicated region
    $region26: #{actor_forward.1} parent=1 // pred_check
      _
    $region27: #{actor_forward.1} parent=1 // pred_check_branch
      %28 = sbr.rel (0) target = $region29
    $region28: #{actor_forward.1} parent=1 // pred_region
      _
    $region29: #{actor_forward.1} parent=1 // pred_fallthru
      _
    // Predicated region
    $region30: #{actor_forward.1} parent=1 // pred_check
      _
    $region31: #{actor_forward.1} parent=1 // pred_check_branch
      %30 = sbr.rel (0) target = $region33
    $region32: #{actor_forward.1} parent=1 // pred_region
      _
    $region33: #{actor_forward.1} parent=1 // pred_fallthru
      _
    %s32 = sld [smem:[#allocation2]]
    %v33 = vld [vmem:[%s1] sm:$0x3]
    %v34 = vpack.c.bf16 %v33, %v33
    %v35 = vld [vmem:[%s2] sm:$0xf]
    %v36 = vld [vmem:[%s3] sm:$0x1]
    %v38 = vlaneseq
    %v39 = vshrl.u32 %v38, 7
    %v40 = vsub.s32 0, %v39
    %v41 = vrot.slane %v36, %v40
    %vm43 = vcmask 64512
    %v45 = vsel %vm43, %v34, 0
    %vm47 = vcmask 1043456
    %v49 = vsel %vm47, %v35, 0
    %51 = vmatprep.subr.bf16.mxu0 0
    %52 = vmatpush1.bf16.msra.mxu0 0
    %53 = vmatprep.subr.bf16.mxu0 0
    %54 = vmatpush1.bf16.msra.mxu0 0
    %55 = vmatprep.subr.bf16.mxu0 0
    %56 = vmatpush1.bf16.msra.mxu0 0
    %57 = vmatprep.subr.bf16.mxu0 0
    %58 = vmatpush1.bf16.msra.mxu0 0
    %59 = vmatprep.subr.bf16.mxu0 0
    %60 = vmatpush1.bf16.msra.mxu0 0
    %61 = vmatprep.subr.bf16.mxu0 0
    %62 = vmatpush1.bf16.msra.mxu0 0
    %63 = vmatprep.subr.bf16.mxu0 0
    %64 = vmatpush1.bf16.msra.mxu0 0
    %65 = vmatprep.subr.bf16.mxu0 0
    %66 = vmatpush1.bf16.msra.mxu0 %v49
    %67 = vmatprep.subr.bf16.mxu0 0
    %68 = vmatpush2.bf16.msra.mxu0 0
    %69 = vmatprep.subr.bf16.mxu0 0
    %70 = vmatpush2.bf16.msra.mxu0 0
    %71 = vmatprep.subr.bf16.mxu0 0
    %72 = vmatpush2.bf16.msra.mxu0 0
    %73 = vmatprep.subr.bf16.mxu0 0
    %74 = vmatpush2.bf16.msra.mxu0 0
    %75 = vmatprep.subr.bf16.mxu0 0
    %76 = vmatpush2.bf16.msra.mxu0 0
    %77 = vmatprep.subr.bf16.mxu0 0
    %78 = vmatpush2.bf16.msra.mxu0 0
    %79 = vmatprep.subr.bf16.mxu0 0
    %80 = vmatpush2.bf16.msra.mxu0 0
    %81 = vmatprep.subr.bf16.mxu0 0
    %82 = vmatpush2.bf16.msra.mxu0 0
    %83 = vmatprep.mubr.bf16.mxu0 0
    %84 = vmatmul.mubr.bf16.gmra.mxu0 %v45
    %v85 = vpop.f32.mrf.mxu0
    %v86 = vadd.f32 %v41, %v85
    %v87 = vpop.f32.mrf.mxu0
    %v88 = vpop.f32.mrf.mxu0
    %v89 = vpop.f32.mrf.mxu0
    %90 = vdwg.mxu0
    %v91 = vmax.f32 %v86, 0.0
    %v92 = vpack.c.bf16 %v91, %v91
    %v93 = vld [vmem:[%s4] sm:$0xf]
    %v94 = vld [vmem:[%s4 + $0x4] sm:$0xf]
    %v95 = vld [vmem:[%s4 + $0x8] sm:$0xf]
    %v96 = vld [vmem:[%s4 + $0xc] sm:$0xf]
    %v97 = vld [vmem:[%s4 + $0x10] sm:$0xf]
    %v98 = vld [vmem:[%s4 + $0x14] sm:$0xf]
    %v99 = vld [vmem:[%s4 + $0x18] sm:$0xf]
    %v100 = vld [vmem:[%s4 + $0x1c] sm:$0xf]
    %v101 = vld [vmem:[%s4 + $0x20] sm:$0xf]
    %v102 = vld [vmem:[%s4 + $0x24] sm:$0xf]
    %v103 = vld [vmem:[%s4 + $0x28] sm:$0xf]
    %v104 = vld [vmem:[%s4 + $0x2c] sm:$0xf]
    %v105 = vld [vmem:[%s4 + $0x30] sm:$0xf]
    %v106 = vld [vmem:[%s4 + $0x34] sm:$0xf]
    %v107 = vld [vmem:[%s4 + $0x38] sm:$0xf]
    %v108 = vld [vmem:[%s4 + $0x3c] sm:$0xf]
    %v109 = vld [vmem:[%s5] sm:$0x1]
    %v111 = vlaneseq
    %v112 = vshrl.u32 %v111, 7
    %v113 = vsub.s32 0, %v112
    %v114 = vrot.slane %v109, %v113
    %v132 = vunpack.c.l.b16 %v93
    %v133 = vunpack.c.l.b16 %v94
    %v134 = vunpack.c.l.b16 %v95
    %v135 = vunpack.c.l.b16 %v96
    %v136 = vunpack.c.l.b16 %v97
    %v137 = vunpack.c.l.b16 %v98
    %v138 = vunpack.c.l.b16 %v99
    %v139 = vunpack.c.l.b16 %v100
    %v140 = vunpack.c.l.b16 %v101
    %v141 = vunpack.c.l.b16 %v102
    %v142 = vunpack.c.l.b16 %v103
    %v143 = vunpack.c.l.b16 %v104
    %v144 = vunpack.c.l.b16 %v105
    %v145 = vunpack.c.l.b16 %v106
    %v146 = vunpack.c.l.b16 %v107
    %v147 = vunpack.c.l.b16 %v108
    %v148 = vpack.c.b16 %v133, %v132
    %v149 = vpack.c.b16 %v135, %v134
    %v150 = vpack.c.b16 %v137, %v136
    %v151 = vpack.c.b16 %v139, %v138
    %v152 = vpack.c.b16 %v141, %v140
    %v153 = vpack.c.b16 %v143, %v142
    %v154 = vpack.c.b16 %v145, %v144
    %v155 = vpack.c.b16 %v147, %v146
    %164 = vmatprep.subr.bf16.mxu0 0
    %165 = vmatpush1.bf16.msra.mxu0 %v155
    %166 = vmatprep.subr.bf16.mxu0 0
    %167 = vmatpush1.bf16.msra.mxu0 %v154
    %168 = vmatprep.subr.bf16.mxu0 0
    %169 = vmatpush1.bf16.msra.mxu0 %v153
    %170 = vmatprep.subr.bf16.mxu0 0
    %171 = vmatpush1.bf16.msra.mxu0 %v152
    %172 = vmatprep.subr.bf16.mxu0 0
    %173 = vmatpush1.bf16.msra.mxu0 %v151
    %174 = vmatprep.subr.bf16.mxu0 0
    %175 = vmatpush1.bf16.msra.mxu0 %v150
    %176 = vmatprep.subr.bf16.mxu0 0
    %177 = vmatpush1.bf16.msra.mxu0 %v149
    %178 = vmatprep.subr.bf16.mxu0 0
    %179 = vmatpush1.bf16.msra.mxu0 %v148
    %180 = vmatprep.subr.bf16.mxu0 0
    %181 = vmatpush2.bf16.msra.mxu0 0
    %182 = vmatprep.subr.bf16.mxu0 0
    %183 = vmatpush2.bf16.msra.mxu0 0
    %184 = vmatprep.subr.bf16.mxu0 0
    %185 = vmatpush2.bf16.msra.mxu0 0
    %186 = vmatprep.subr.bf16.mxu0 0
    %187 = vmatpush2.bf16.msra.mxu0 0
    %188 = vmatprep.subr.bf16.mxu0 0
    %189 = vmatpush2.bf16.msra.mxu0 0
    %190 = vmatprep.subr.bf16.mxu0 0
    %191 = vmatpush2.bf16.msra.mxu0 0
    %192 = vmatprep.subr.bf16.mxu0 0
    %193 = vmatpush2.bf16.msra.mxu0 0
    %194 = vmatprep.subr.bf16.mxu0 0
    %195 = vmatpush2.bf16.msra.mxu0 0
    %196 = vmatprep.mubr.bf16.mxu0 0
    %197 = vmatmul.mubr.bf16.gmra.mxu0 %v92
    %v198 = vpop.f32.mrf.mxu0
    %v199 = vadd.f32 %v114, %v198
    %v200 = vpop.f32.mrf.mxu0
    %v201 = vpop.f32.mrf.mxu0
    %v202 = vpop.f32.mrf.mxu0
    %203 = vdwg.mxu0
    %v204 = vmax.f32 %v199, 0.0
    %v205 = vpack.c.bf16 %v204, %v204
    %v206 = vld [vmem:[%s6] sm:$0xf]
    %v207 = vld [vmem:[%s6 + $0x4] sm:$0xf]
    %v208 = vld [vmem:[%s6 + $0x8] sm:$0xf]
    %v209 = vld [vmem:[%s6 + $0xc] sm:$0xf]
    %v210 = vld [vmem:[%s6 + $0x10] sm:$0xf]
    %v211 = vld [vmem:[%s6 + $0x14] sm:$0xf]
    %v212 = vld [vmem:[%s6 + $0x18] sm:$0xf]
    %v213 = vld [vmem:[%s6 + $0x1c] sm:$0xf]
    %v214 = vld [vmem:[%s6 + $0x20] sm:$0xf]
    %v215 = vld [vmem:[%s6 + $0x24] sm:$0xf]
    %v216 = vld [vmem:[%s6 + $0x28] sm:$0xf]
    %v217 = vld [vmem:[%s6 + $0x2c] sm:$0xf]
    %v218 = vld [vmem:[%s6 + $0x30] sm:$0xf]
    %v219 = vld [vmem:[%s6 + $0x34] sm:$0xf]
    %v220 = vld [vmem:[%s6 + $0x38] sm:$0xf]
    %v221 = vld [vmem:[%s6 + $0x3c] sm:$0xf]
    %v222 = vld [vmem:[%s7] sm:$0x1]
    %v224 = vlaneseq
    %v225 = vshrl.u32 %v224, 7
    %v226 = vsub.s32 0, %v225
    %v227 = vrot.slane %v222, %v226
    %v245 = vunpack.c.l.b16 %v206
    %v246 = vunpack.c.l.b16 %v207
    %v247 = vunpack.c.l.b16 %v208
    %v248 = vunpack.c.l.b16 %v209
    %v249 = vunpack.c.l.b16 %v210
    %v250 = vunpack.c.l.b16 %v211
    %v251 = vunpack.c.l.b16 %v212
    %v252 = vunpack.c.l.b16 %v213
    %v253 = vunpack.c.l.b16 %v214
    %v254 = vunpack.c.l.b16 %v215
    %v255 = vunpack.c.l.b16 %v216
    %v256 = vunpack.c.l.b16 %v217
    %v257 = vunpack.c.l.b16 %v218
    %v258 = vunpack.c.l.b16 %v219
    %v259 = vunpack.c.l.b16 %v220
    %v260 = vunpack.c.l.b16 %v221
    %v261 = vpack.c.b16 %v246, %v245
    %v262 = vpack.c.b16 %v248, %v247
    %v263 = vpack.c.b16 %v250, %v249
    %v264 = vpack.c.b16 %v252, %v251
    %v265 = vpack.c.b16 %v254, %v253
    %v266 = vpack.c.b16 %v256, %v255
    %v267 = vpack.c.b16 %v258, %v257
    %v268 = vpack.c.b16 %v260, %v259
    %277 = vmatprep.subr.bf16.mxu0 0
    %278 = vmatpush1.bf16.msra.mxu0 %v268
    %279 = vmatprep.subr.bf16.mxu0 0
    %280 = vmatpush1.bf16.msra.mxu0 %v267
    %281 = vmatprep.subr.bf16.mxu0 0
    %282 = vmatpush1.bf16.msra.mxu0 %v266
    %283 = vmatprep.subr.bf16.mxu0 0
    %284 = vmatpush1.bf16.msra.mxu0 %v265
    %285 = vmatprep.subr.bf16.mxu0 0
    %286 = vmatpush1.bf16.msra.mxu0 %v264
    %287 = vmatprep.subr.bf16.mxu0 0
    %288 = vmatpush1.bf16.msra.mxu0 %v263
    %289 = vmatprep.subr.bf16.mxu0 0
    %290 = vmatpush1.bf16.msra.mxu0 %v262
    %291 = vmatprep.subr.bf16.mxu0 0
    %292 = vmatpush1.bf16.msra.mxu0 %v261
    %293 = vmatprep.subr.bf16.mxu0 0
    %294 = vmatpush2.bf16.msra.mxu0 0
    %295 = vmatprep.subr.bf16.mxu0 0
    %296 = vmatpush2.bf16.msra.mxu0 0
    %297 = vmatprep.subr.bf16.mxu0 0
    %298 = vmatpush2.bf16.msra.mxu0 0
    %299 = vmatprep.subr.bf16.mxu0 0
    %300 = vmatpush2.bf16.msra.mxu0 0
    %301 = vmatprep.subr.bf16.mxu0 0
    %302 = vmatpush2.bf16.msra.mxu0 0
    %303 = vmatprep.subr.bf16.mxu0 0
    %304 = vmatpush2.bf16.msra.mxu0 0
    %305 = vmatprep.subr.bf16.mxu0 0
    %306 = vmatpush2.bf16.msra.mxu0 0
    %307 = vmatprep.subr.bf16.mxu0 0
    %308 = vmatpush2.bf16.msra.mxu0 0
    %309 = vmatprep.mubr.bf16.mxu0 0
    %310 = vmatmul.mubr.bf16.gmra.mxu0 %v205
    %v311 = vpop.f32.mrf.mxu0
    %v312 = vadd.f32 %v227, %v311
    %v313 = vpop.f32.mrf.mxu0
    %v314 = vpop.f32.mrf.mxu0
    %v315 = vpop.f32.mrf.mxu0
    %316 = vdwg.mxu0
    %v317 = vtanh.pop %v312
    %v318 = vstv %s32
    %v319 = vmul.f32 %v317, %v318
    %vm320 = vcmask 25600
    %321 = vst.msk [vmem:[#allocation3] sm:$0x3] %vm320, %v319
    // Predicated region
    $region34: #{actor_forward.1} parent=1 // pred_check
      _
    $region35: #{actor_forward.1} parent=1 // pred_check_branch
      %323 = sbr.rel (0) target = $region37
    $region36: #{actor_forward.1} parent=1 // pred_region
      %s325 = ssub.s32 32, 32
      %326 = vsyncadd [#allocation4], %s325
      %s328 = sshll.u32 [#allocation3], 4
      %s329 = int_to_ptr.vmem [resolvable:$true] %s328
      %331 = dma.vmem_to_hbm [thread:$0]  %s329, 32, %s8, [#allocation4]
    $region37: #{actor_forward.1} parent=1 // pred_fallthru
      _
    // Predicated region
    $region38: #{actor_forward.1} parent=1 // pred_check
      _
    $region39: #{actor_forward.1} parent=1 // pred_check_branch
      %333 = sbr.rel (0) target = $region41
    $region40: #{actor_forward.1} parent=1 // pred_region
      %334 = dma.done [#allocation4], 32
    $region41: #{actor_forward.1} parent=1 // pred_fallthru
      _
    %335 = vsyncpa [#allocation4], 1

</llo_original>
